<compile_context>
chip_gen: v5e
topology: v5e:2x2
jax: 0.10.0
libtpu: 0.0.40
codegen_flags: <defaults>
</compile_context>

<pallas_src>
import functools

import jax
import jax.numpy as jnp
from jax.experimental import pallas as pl
from jax.experimental.pallas import tpu as pltpu

_NEG_INF = -1e30  # finite "minus infinity" for padded logits


def _round_up(v, m):
    return (v + m - 1) // m * m


def _pick_k_block(kdim):
    """Largest of {512, 256, 128} dividing kdim (kdim is a multiple of 128)."""
    for cand in (512, 256, 128):
        if kdim % cand == 0:
            return cand
    return kdim


# --------------------------------------------------------------------------
# Kernel 1: support = a @ b  (bf16 MXU inputs, f32 accumulate, cast on store)
# --------------------------------------------------------------------------
def _mm_kernel(a_ref, b_ref, o_ref, acc_ref):
    @pl.when(pl.program_id(1) == 0)
    def _():
        acc_ref[...] = jnp.zeros_like(acc_ref)

    acc_ref[...] += jnp.dot(a_ref[...], b_ref[...],
                            preferred_element_type=jnp.float32)

    @pl.when(pl.program_id(1) == pl.num_programs(1) - 1)
    def _():
        o_ref[...] = acc_ref[...].astype(o_ref.dtype)


def _matmul(a, b, *, bm, out_dtype):
    """a: (M, K) bf16, b: (K, Fout) bf16; M % bm == 0, K % 128 == 0,
    Fout a multiple of 128 (held whole in the lane dim)."""
    M, K = a.shape
    Fout = b.shape[1]
    bk = _pick_k_block(K)
    grid = (M // bm, K // bk)

    return pl.pallas_call(
        _mm_kernel,
        out_shape=jax.ShapeDtypeStruct((M, Fout), out_dtype),
        grid_spec=pltpu.PrefetchScalarGridSpec(
            num_scalar_prefetch=0,
            grid=grid,
            in_specs=[
                pl.BlockSpec((bm, bk), lambda i, k: (i, k)),     # a tile
                pl.BlockSpec((bk, Fout), lambda i, k: (k, 0)),   # b tile
            ],
            out_specs=pl.BlockSpec((bm, Fout), lambda i, k: (i, 0)),
            scratch_shapes=[pltpu.VMEM((bm, Fout), jnp.float32)],
        ),
        compiler_params=pltpu.CompilerParams(
            dimension_semantics=("parallel", "arbitrary")),
    )(a, b)


# --------------------------------------------------------------------------
# Kernel 2: out = act(adj @ support + b)   (pure spmm + fused f32 epilogue)
# --------------------------------------------------------------------------
def _spmm_kernel(adj_ref, s_ref, b_ref, out_ref, acc_ref, *, activation):
    k = pl.program_id(1)

    @pl.when(k == 0)
    def _():
        acc_ref[...] = jnp.zeros_like(acc_ref)

    acc_ref[...] += jnp.dot(adj_ref[...], s_ref[...],
                            preferred_element_type=jnp.float32)

    @pl.when(k == pl.num_programs(1) - 1)
    def _():
        z = acc_ref[...] + b_ref[...]  # f32 epilogue
        if activation == "relu":
            out_ref[...] = jnp.maximum(z, 0.0).astype(out_ref.dtype)
        elif activation == "log_softmax":
            m = jnp.max(z, axis=1, keepdims=True)
            shifted = z - m
            lse = jnp.log(jnp.sum(jnp.exp(shifted), axis=1, keepdims=True))
            out_ref[...] = (shifted - lse).astype(out_ref.dtype)
        else:
            out_ref[...] = z.astype(out_ref.dtype)


def _spmm(adj, support, b, *, blk, activation, out_dtype):
    """adj: (Np, Np) bf16, support: (Np, Fout) bf16, b: (1, Fout) f32."""
    Np = adj.shape[0]
    Fout = support.shape[1]
    grid = (Np // blk, Np // blk)

    kernel = functools.partial(_spmm_kernel, activation=activation)

    return pl.pallas_call(
        kernel,
        out_shape=jax.ShapeDtypeStruct((Np, Fout), out_dtype),
        grid_spec=pltpu.PrefetchScalarGridSpec(
            num_scalar_prefetch=0,
            grid=grid,
            in_specs=[
                pl.BlockSpec((blk, blk), lambda i, k: (i, k)),    # adj tile
                pl.BlockSpec((blk, Fout), lambda i, k: (k, 0)),   # support rows
                pl.BlockSpec((1, Fout), lambda i, k: (0, 0)),     # bias (whole)
            ],
            out_specs=pl.BlockSpec((blk, Fout), lambda i, k: (i, 0)),
            scratch_shapes=[pltpu.VMEM((blk, Fout), jnp.float32)],
        ),
        compiler_params=pltpu.CompilerParams(
            dimension_semantics=("parallel", "arbitrary")),
    )(adj, support, b)


# --------------------------------------------------------------------------
# GCN forward
# --------------------------------------------------------------------------
def gcn_forward(x, adj, w1, b1, w2, b2, *, blk=256):
    """log_softmax(adj @ relu(adj @ (x @ W1) + b1) @ W2 + b2, dim=1)."""
    N, Fin = x.shape
    H = w1.shape[1]
    C = w2.shape[1]

    # Big tiles for real graphs; do not over-pad tiny demo graphs.
    blk = min(blk, _round_up(N, 128))
    Np = _round_up(N, blk)
    Finp = _round_up(Fin, 128)
    Hp = _round_up(H, 128)
    Cp = _round_up(C, 128)

    bf16 = jnp.bfloat16
    f32 = jnp.float32

    def _pad2(a, rows, cols, dtype):
        r, c = a.shape
        a = a.astype(dtype)
        if r == rows and c == cols:
            return a  # already aligned: cast only, no extra HBM pad pass
        return jnp.zeros((rows, cols), dtype).at[:r, :c].set(a)

    xp = _pad2(x, Np, Finp, bf16)
    adjp = _pad2(adj, Np, Np, bf16)
    w1p = _pad2(w1, Finp, Hp, bf16)
    w2p = _pad2(w2, Hp, Cp, bf16)
    b1p = _pad2(b1.reshape(1, H), 1, Hp, f32)
    # Padded classes get a huge negative bias so log_softmax ignores them.
    b2p = jnp.full((1, Cp), _NEG_INF, f32).at[:, :C].set(
        b2.reshape(1, C).astype(f32))

    # Layer 1: support hoisted, then spmm + bias + relu (bf16 out -> next MXU).
    s1 = _matmul(xp, w1p, bm=blk, out_dtype=bf16)                      # (Np, Hp)
    h = _spmm(adjp, s1, b1p, blk=blk, activation="relu", out_dtype=bf16)
    # Dropout: identity (eval mode).
    # Layer 2: support hoisted, then spmm + bias + log_softmax (f32 out).
    s2 = _matmul(h, w2p, bm=blk, out_dtype=bf16)                       # (Np, Cp)
    logp = _spmm(adjp, s2, b2p, blk=blk, activation="log_softmax",
                 out_dtype=f32)

    return logp[:N, :C]


# --------------------------------------------------------------------------
# Parameter init + references
# --------------------------------------------------------------------------
def init_gcn_params(key, nfeat, nhid, nclass):
    """Mimic GraphConvolution.reset_parameters: uniform(-stdv, stdv) with
    stdv = 1/sqrt(out_features)."""
    k1, k2, k3, k4 = jax.random.split(key, 4)
    stdv1 = 1.0 / (nhid ** 0.5)
    stdv2 = 1.0 / (nclass ** 0.5)
    w1 = jax.random.uniform(k1, (nfeat, nhid), jnp.float32, -stdv1, stdv1)
    b1 = jax.random.uniform(k2, (1, nhid), jnp.float32, -stdv1, stdv1)
    w2 = jax.random.uniform(k3, (nhid, nclass), jnp.float32, -stdv2, stdv2)
    b2 = jax.random.uniform(k4, (1, nclass), jnp.float32, -stdv2, stdv2)
    return w1, b1, w2, b2


def gcn_reference_f32(x, adj, w1, b1, w2, b2):
    h = jnp.maximum(adj @ (x @ w1) + b1, 0.0)
    z = adj @ (h @ w2) + b2
    return jax.nn.log_softmax(z, axis=1)


def gcn_reference_mixed(x, adj, w1, b1, w2, b2):
    """Mirrors the kernel's numerics: bf16 MXU inputs, f32 accumulation,
    support rounded to bf16 before the spmm."""
    bf = jnp.bfloat16
    xb, ab = x.astype(bf), adj.astype(bf)
    s1 = jnp.dot(xb, w1.astype(bf), preferred_element_type=jnp.float32)
    h = jnp.maximum(
        jnp.dot(ab, s1.astype(bf), preferred_element_type=jnp.float32) + b1, 0.0)
    s2 = jnp.dot(h.astype(bf), w2.astype(bf), preferred_element_type=jnp.float32)
    z = jnp.dot(ab, s2.astype(bf), preferred_element_type=jnp.float32) + b2
    return jax.nn.log_softmax(z, axis=1)


if __name__ == "__main__":
    key = jax.random.PRNGKey(0)
    kx, kadj, kparams = jax.random.split(key, 3)

    # Small GCN: N nodes, nfeat input features, nhid hidden, nclass outputs.
    N, nfeat, nhid, nclass = 64, 32, 32, 16

    x = jax.random.normal(kx, (N, nfeat), jnp.float32)

    # Symmetric row-normalized adjacency with self loops (typical GCN input).
    a = (jax.random.uniform(kadj, (N, N)) < 0.1).astype(jnp.float32)
    a = jnp.maximum(a, a.T) + jnp.eye(N, dtype=jnp.float32)
    adj = a / jnp.sum(a, axis=1, keepdims=True)

    w1, b1, w2, b2 = init_gcn_params(kparams, nfeat, nhid, nclass)

    fwd = jax.jit(gcn_forward)
    out = fwd(x, adj, w1, b1, w2, b2)
    out = jax.block_until_ready(out)
    assert out.shape == (N, nclass)

    # Check against a reference with matching mixed precision (tight) and
    # against the pure-f32 reference (loose, bf16-input rounding only).
    ref_mixed = gcn_reference_mixed(x, adj, w1, b1, w2, b2)
    ref_f32 = gcn_reference_f32(x, adj, w1, b1, w2, b2)
    assert jnp.max(jnp.abs(out - ref_mixed)) < 2e-2
    assert jnp.max(jnp.abs(out - ref_f32)) < 1e-1

    print("KERNEL_OK")
</pallas_src>

<mosaic_0001>
module attributes {stable_mosaic.version = 11 : i64} {
  func.func @_spmm_kernel(%arg0: i32, %arg1: i32, %arg2: memref<128x128xbf16, #tpu.memory_space<vmem>>, %arg3: memref<128x128xbf16, #tpu.memory_space<vmem>>, %arg4: memref<1x128xf32, #tpu.memory_space<vmem>>, %arg5: memref<128x128xbf16, #tpu.memory_space<vmem>>, %arg6: memref<128x128xf32, #tpu.memory_space<vmem>>) attributes {dimension_semantics = [#tpu.dimension_semantics<parallel>, #tpu.dimension_semantics<arbitrary>], iteration_bounds = array<i64: 1, 1>, scalar_prefetch = 0 : i64, scratch_operands = 1 : i64, tpu.core_type = #tpu.core_type<tc>, window_params = [{transform_indices = @transform_0, window_bounds = array<i64: 128, 128>}, {transform_indices = @transform_1, window_bounds = array<i64: 128, 128>}, {pipeline_mode = #tpu.pipeline_mode<synchronous>, transform_indices = @transform_2, window_bounds = array<i64: 1, 128>}, {transform_indices = @transform_3, window_bounds = array<i64: 128, 128>}]} {
    %c0_i32 = arith.constant 0 : i32
    %0 = arith.cmpi eq, %arg1, %c0_i32 : i32
    %1 = arith.extui %0 : i1 to i32
    %c0_i32_0 = arith.constant 0 : i32
    %2 = arith.cmpi ne, %1, %c0_i32_0 : i32
    scf.if %2 {
      %cst_10 = arith.constant 0.000000e+00 : f32
      %12 = vector.broadcast %cst_10 : f32 to vector<128x128xf32>
      %c0_11 = arith.constant 0 : index
      %c0_12 = arith.constant 0 : index
      %13 = vector.load %arg6[%c0_11, %c0_12] : memref<128x128xf32, #tpu.memory_space<vmem>>, vector<128x128xf32>
      tpu.vector_store %arg6[%c0_11, %c0_12], %12 {strides = array<i32>} : memref<128x128xf32, #tpu.memory_space<vmem>>, vector<128x128xf32>,
    } else {
    }
    %c0 = arith.constant 0 : index
    %c0_1 = arith.constant 0 : index
    %3 = vector.load %arg6[%c0, %c0_1] : memref<128x128xf32, #tpu.memory_space<vmem>>, vector<128x128xf32>
    %c0_2 = arith.constant 0 : index
    %c0_3 = arith.constant 0 : index
    %4 = vector.load %arg2[%c0_2, %c0_3] : memref<128x128xbf16, #tpu.memory_space<vmem>>, vector<128x128xbf16>
    %c0_4 = arith.constant 0 : index
    %c0_5 = arith.constant 0 : index
    %5 = vector.load %arg3[%c0_4, %c0_5] : memref<128x128xbf16, #tpu.memory_space<vmem>>, vector<128x128xbf16>
    %cst = arith.constant dense<0.000000e+00> : vector<128x128xf32>
    %6 = tpu.matmul %4, %5, %cst {dimension_numbers = #tpu.dot_dimension_numbers<[1], [0], [0], [1], [0, 0, 1, 1], [], []>} : vector<128x128xbf16>, vector<128x128xbf16>, vector<128x128xf32> -> vector<128x128xf32>
    %7 = arith.addf %3, %6 : vector<128x128xf32>
    %c0_6 = arith.constant 0 : index
    %c0_7 = arith.constant 0 : index
    %8 = vector.load %arg6[%c0_6, %c0_7] : memref<128x128xf32, #tpu.memory_space<vmem>>, vector<128x128xf32>
    tpu.vector_store %arg6[%c0_6, %c0_7], %7 {strides = array<i32>} : memref<128x128xf32, #tpu.memory_space<vmem>>, vector<128x128xf32>,
    %c0_i32_8 = arith.constant 0 : i32
    %9 = arith.cmpi eq, %arg1, %c0_i32_8 : i32
    %10 = arith.extui %9 : i1 to i32
    %c0_i32_9 = arith.constant 0 : i32
    %11 = arith.cmpi ne, %10, %c0_i32_9 : i32
    scf.if %11 {
      %c0_10 = arith.constant 0 : index
      %c0_11 = arith.constant 0 : index
      %12 = vector.load %arg6[%c0_10, %c0_11] : memref<128x128xf32, #tpu.memory_space<vmem>>, vector<128x128xf32>
      %c0_12 = arith.constant 0 : index
      %c0_13 = arith.constant 0 : index
      %13 = vector.load %arg4[%c0_12, %c0_13] : memref<1x128xf32, #tpu.memory_space<vmem>>, vector<1x128xf32>
      %14 = vector.broadcast %13 : vector<1x128xf32> to vector<128x128xf32>
      %15 = arith.addf %12, %14 : vector<128x128xf32>
      %cst_14 = arith.constant 0.000000e+00 : f32
      %16 = vector.broadcast %cst_14 : f32 to vector<128x128xf32>
      %17 = arith.maximumf %15, %16 : vector<128x128xf32>
      %18 = arith.truncf %17 : vector<128x128xf32> to vector<128x128xbf16>
      %c0_15 = arith.constant 0 : index
      %c0_16 = arith.constant 0 : index
      %19 = vector.load %arg5[%c0_15, %c0_16] : memref<128x128xbf16, #tpu.memory_space<vmem>>, vector<128x128xbf16>
      tpu.vector_store %arg5[%c0_15, %c0_16], %18 {strides = array<i32>} : memref<128x128xbf16, #tpu.memory_space<vmem>>, vector<128x128xbf16>,
    } else {
    }
    return
  }
  func.func @transform_0(%arg0: i32, %arg1: i32) -> (i32, i32) {
    %c0_i32 = arith.constant 0 : i32
    return %arg0, %arg1 : i32, i32
  }
  func.func @transform_1(%arg0: i32, %arg1: i32) -> (i32, i32) {
    %c0_i32 = arith.constant 0 : i32
    %c0_i32_0 = arith.constant 0 : i32
    return %arg1, %c0_i32 : i32, i32
  }
  func.func @transform_2(%arg0: i32, %arg1: i32) -> (i32, i32) {
    %c0_i32 = arith.constant 0 : i32
    %c0_i32_0 = arith.constant 0 : i32
    %c0_i32_1 = arith.constant 0 : i32
    return %c0_i32, %c0_i32_0 : i32, i32
  }
  func.func @transform_3(%arg0: i32, %arg1: i32) -> (i32, i32) {
    %c0_i32 = arith.constant 0 : i32
    %c0_i32_0 = arith.constant 0 : i32
    return %arg0, %c0_i32 : i32, i32
  }
}

module attributes {stable_mosaic.version = 11 : i64} {
  func.func @_mm_kernel(%arg0: i32, %arg1: i32, %arg2: memref<128x128xbf16, #tpu.memory_space<vmem>>, %arg3: memref<128x128xbf16, #tpu.memory_space<vmem>>, %arg4: memref<128x128xbf16, #tpu.memory_space<vmem>>, %arg5: memref<128x128xf32, #tpu.memory_space<vmem>>) attributes {dimension_semantics = [#tpu.dimension_semantics<parallel>, #tpu.dimension_semantics<arbitrary>], iteration_bounds = array<i64: 1, 1>, scalar_prefetch = 0 : i64, scratch_operands = 1 : i64, tpu.core_type = #tpu.core_type<tc>, window_params = [{transform_indices = @transform_0, window_bounds = array<i64: 128, 128>}, {transform_indices = @transform_1, window_bounds = array<i64: 128, 128>}, {transform_indices = @transform_2, window_bounds = array<i64: 128, 128>}]} {
    %c0_i32 = arith.constant 0 : i32
    %0 = arith.cmpi eq, %arg1, %c0_i32 : i32
    %1 = arith.extui %0 : i1 to i32
    %c0_i32_0 = arith.constant 0 : i32
    %2 = arith.cmpi ne, %1, %c0_i32_0 : i32
    scf.if %2 {
      %cst_10 = arith.constant 0.000000e+00 : f32
      %12 = vector.broadcast %cst_10 : f32 to vector<128x128xf32>
      %c0_11 = arith.constant 0 : index
      %c0_12 = arith.constant 0 : index
      %13 = vector.load %arg5[%c0_11, %c0_12] : memref<128x128xf32, #tpu.memory_space<vmem>>, vector<128x128xf32>
      tpu.vector_store %arg5[%c0_11, %c0_12], %12 {strides = array<i32>} : memref<128x128xf32, #tpu.memory_space<vmem>>, vector<128x128xf32>,
    } else {
    }
    %c0 = arith.constant 0 : index
    %c0_1 = arith.constant 0 : index
    %3 = vector.load %arg5[%c0, %c0_1] : memref<128x128xf32, #tpu.memory_space<vmem>>, vector<128x128xf32>
    %c0_2 = arith.constant 0 : index
    %c0_3 = arith.constant 0 : index
    %4 = vector.load %arg2[%c0_2, %c0_3] : memref<128x128xbf16, #tpu.memory_space<vmem>>, vector<128x128xbf16>
    %c0_4 = arith.constant 0 : index
    %c0_5 = arith.constant 0 : index
    %5 = vector.load %arg3[%c0_4, %c0_5] : memref<128x128xbf16, #tpu.memory_space<vmem>>, vector<128x128xbf16>
    %cst = arith.constant dense<0.000000e+00> : vector<128x128xf32>
    %6 = tpu.matmul %4, %5, %cst {dimension_numbers = #tpu.dot_dimension_numbers<[1], [0], [0], [1], [0, 0, 1, 1], [], []>} : vector<128x128xbf16>, vector<128x128xbf16>, vector<128x128xf32> -> vector<128x128xf32>
    %7 = arith.addf %3, %6 : vector<128x128xf32>
    %c0_6 = arith.constant 0 : index
    %c0_7 = arith.constant 0 : index
    %8 = vector.load %arg5[%c0_6, %c0_7] : memref<128x128xf32, #tpu.memory_space<vmem>>, vector<128x128xf32>
    tpu.vector_store %arg5[%c0_6, %c0_7], %7 {strides = array<i32>} : memref<128x128xf32, #tpu.memory_space<vmem>>, vector<128x128xf32>,
    %c0_i32_8 = arith.constant 0 : i32
    %9 = arith.cmpi eq, %arg1, %c0_i32_8 : i32
    %10 = arith.extui %9 : i1 to i32
    %c0_i32_9 = arith.constant 0 : i32
    %11 = arith.cmpi ne, %10, %c0_i32_9 : i32
    scf.if %11 {
      %c0_10 = arith.constant 0 : index
      %c0_11 = arith.constant 0 : index
      %12 = vector.load %arg5[%c0_10, %c0_11] : memref<128x128xf32, #tpu.memory_space<vmem>>, vector<128x128xf32>
      %13 = arith.truncf %12 : vector<128x128xf32> to vector<128x128xbf16>
      %c0_12 = arith.constant 0 : index
      %c0_13 = arith.constant 0 : index
      %14 = vector.load %arg4[%c0_12, %c0_13] : memref<128x128xbf16, #tpu.memory_space<vmem>>, vector<128x128xbf16>
      tpu.vector_store %arg4[%c0_12, %c0_13], %13 {strides = array<i32>} : memref<128x128xbf16, #tpu.memory_space<vmem>>, vector<128x128xbf16>,
    } else {
    }
    return
  }
  func.func @transform_0(%arg0: i32, %arg1: i32) -> (i32, i32) {
    %c0_i32 = arith.constant 0 : i32
    return %arg0, %arg1 : i32, i32
  }
  func.func @transform_1(%arg0: i32, %arg1: i32) -> (i32, i32) {
    %c0_i32 = arith.constant 0 : i32
    %c0_i32_0 = arith.constant 0 : i32
    return %arg1, %c0_i32 : i32, i32
  }
  func.func @transform_2(%arg0: i32, %arg1: i32) -> (i32, i32) {
    %c0_i32 = arith.constant 0 : i32
    %c0_i32_0 = arith.constant 0 : i32
    return %arg0, %c0_i32 : i32, i32
  }
}

module attributes {stable_mosaic.version = 11 : i64} {
  func.func @_spmm_kernel(%arg0: i32, %arg1: i32, %arg2: memref<128x128xbf16, #tpu.memory_space<vmem>>, %arg3: memref<128x128xbf16, #tpu.memory_space<vmem>>, %arg4: memref<1x128xf32, #tpu.memory_space<vmem>>, %arg5: memref<128x128xf32, #tpu.memory_space<vmem>>, %arg6: memref<128x128xf32, #tpu.memory_space<vmem>>) attributes {dimension_semantics = [#tpu.dimension_semantics<parallel>, #tpu.dimension_semantics<arbitrary>], iteration_bounds = array<i64: 1, 1>, scalar_prefetch = 0 : i64, scratch_operands = 1 : i64, tpu.core_type = #tpu.core_type<tc>, window_params = [{transform_indices = @transform_0, window_bounds = array<i64: 128, 128>}, {transform_indices = @transform_1, window_bounds = array<i64: 128, 128>}, {pipeline_mode = #tpu.pipeline_mode<synchronous>, transform_indices = @transform_2, window_bounds = array<i64: 1, 128>}, {transform_indices = @transform_3, window_bounds = array<i64: 128, 128>}]} {
    %c0_i32 = arith.constant 0 : i32
    %0 = arith.cmpi eq, %arg1, %c0_i32 : i32
    %1 = arith.extui %0 : i1 to i32
    %c0_i32_0 = arith.constant 0 : i32
    %2 = arith.cmpi ne, %1, %c0_i32_0 : i32
    scf.if %2 {
      %cst_10 = arith.constant 0.000000e+00 : f32
      %12 = vector.broadcast %cst_10 : f32 to vector<128x128xf32>
      %c0_11 = arith.constant 0 : index
      %c0_12 = arith.constant 0 : index
      %13 = vector.load %arg6[%c0_11, %c0_12] : memref<128x128xf32, #tpu.memory_space<vmem>>, vector<128x128xf32>
      tpu.vector_store %arg6[%c0_11, %c0_12], %12 {strides = array<i32>} : memref<128x128xf32, #tpu.memory_space<vmem>>, vector<128x128xf32>,
    } else {
    }
    %c0 = arith.constant 0 : index
    %c0_1 = arith.constant 0 : index
    %3 = vector.load %arg6[%c0, %c0_1] : memref<128x128xf32, #tpu.memory_space<vmem>>, vector<128x128xf32>
    %c0_2 = arith.constant 0 : index
    %c0_3 = arith.constant 0 : index
    %4 = vector.load %arg2[%c0_2, %c0_3] : memref<128x128xbf16, #tpu.memory_space<vmem>>, vector<128x128xbf16>
    %c0_4 = arith.constant 0 : index
    %c0_5 = arith.constant 0 : index
    %5 = vector.load %arg3[%c0_4, %c0_5] : memref<128x128xbf16, #tpu.memory_space<vmem>>, vector<128x128xbf16>
    %cst = arith.constant dense<0.000000e+00> : vector<128x128xf32>
    %6 = tpu.matmul %4, %5, %cst {dimension_numbers = #tpu.dot_dimension_numbers<[1], [0], [0], [1], [0, 0, 1, 1], [], []>} : vector<128x128xbf16>, vector<128x128xbf16>, vector<128x128xf32> -> vector<128x128xf32>
    %7 = arith.addf %3, %6 : vector<128x128xf32>
    %c0_6 = arith.constant 0 : index
    %c0_7 = arith.constant 0 : index
    %8 = vector.load %arg6[%c0_6, %c0_7] : memref<128x128xf32, #tpu.memory_space<vmem>>, vector<128x128xf32>
    tpu.vector_store %arg6[%c0_6, %c0_7], %7 {strides = array<i32>} : memref<128x128xf32, #tpu.memory_space<vmem>>, vector<128x128xf32>,
    %c0_i32_8 = arith.constant 0 : i32
    %9 = arith.cmpi eq, %arg1, %c0_i32_8 : i32
    %10 = arith.extui %9 : i1 to i32
    %c0_i32_9 = arith.constant 0 : i32
    %11 = arith.cmpi ne, %10, %c0_i32_9 : i32
    scf.if %11 {
      %c0_10 = arith.constant 0 : index
      %c0_11 = arith.constant 0 : index
      %12 = vector.load %arg6[%c0_10, %c0_11] : memref<128x128xf32, #tpu.memory_space<vmem>>, vector<128x128xf32>
      %c0_12 = arith.constant 0 : index
      %c0_13 = arith.constant 0 : index
      %13 = vector.load %arg4[%c0_12, %c0_13] : memref<1x128xf32, #tpu.memory_space<vmem>>, vector<1x128xf32>
      %14 = vector.broadcast %13 : vector<1x128xf32> to vector<128x128xf32>
      %15 = arith.addf %12, %14 : vector<128x128xf32>
      %cst_14 = arith.constant dense<0xFF800000> : vector<128xf32>
      %16 = vector.multi_reduction <maximumf>, %15, %cst_14 [1] : vector<128x128xf32> to vector<128xf32>
      %17 = vector.shape_cast %16 : vector<128xf32> to vector<128x1xf32>
      %18 = vector.broadcast %17 : vector<128x1xf32> to vector<128x128xf32>
      %19 = arith.subf %15, %18 : vector<128x128xf32>
      %20 = math.exp %19 : vector<128x128xf32>
      %cst_15 = arith.constant dense<0.000000e+00> : vector<128xf32>
      %21 = vector.multi_reduction <add>, %20, %cst_15 [1] : vector<128x128xf32> to vector<128xf32>
      %22 = vector.shape_cast %21 : vector<128xf32> to vector<128x1xf32>
      %23 = math.log %22 : vector<128x1xf32>
      %24 = vector.broadcast %23 : vector<128x1xf32> to vector<128x128xf32>
      %25 = arith.subf %19, %24 : vector<128x128xf32>
      %c0_16 = arith.constant 0 : index
      %c0_17 = arith.constant 0 : index
      %26 = vector.load %arg5[%c0_16, %c0_17] : memref<128x128xf32, #tpu.memory_space<vmem>>, vector<128x128xf32>
      tpu.vector_store %arg5[%c0_16, %c0_17], %25 {strides = array<i32>} : memref<128x128xf32, #tpu.memory_space<vmem>>, vector<128x128xf32>,
    } else {
    }
    return
  }
  func.func @transform_0(%arg0: i32, %arg1: i32) -> (i32, i32) {
    %c0_i32 = arith.constant 0 : i32
    return %arg0, %arg1 : i32, i32
  }
  func.func @transform_1(%arg0: i32, %arg1: i32) -> (i32, i32) {
    %c0_i32 = arith.constant 0 : i32
    %c0_i32_0 = arith.constant 0 : i32
    return %arg1, %c0_i32 : i32, i32
  }
  func.func @transform_2(%arg0: i32, %arg1: i32) -> (i32, i32) {
    %c0_i32 = arith.constant 0 : i32
    %c0_i32_0 = arith.constant 0 : i32
    %c0_i32_1 = arith.constant 0 : i32
    return %c0_i32, %c0_i32_0 : i32, i32
  }
  func.func @transform_3(%arg0: i32, %arg1: i32) -> (i32, i32) {
    %c0_i32 = arith.constant 0 : i32
    %c0_i32_0 = arith.constant 0 : i32
    return %arg0, %c0_i32 : i32, i32
  }
}

</mosaic_0001>

<llo_original>
// kernel: gcn_forward.4
$region0: #{gcn_forward.4}
  #allocation0 [shape = 'u32[]', space=smem, size = 0x4, offset = 0x4, fixed_abs, tag = 'smem constant byte address 0x4 - core index']
  #allocation1 [shape = 'u32[72,128]{1,0:T(1,128)}', space=vmem, size = 0x9000, scoped, tag = 'internal scratch']
  #allocation2 [shape = 'f32[128,128]{1,0:T(8,128)}', space=vmem, size = 0x10000, scoped, tag = 'scratch operand']
  %s0 = inlined_call_operand.vmem [shape: bf16[128,128], index: 0, kind: input, shape index: {}]
  %s1 = inlined_call_operand.vmem [shape: bf16[128,128], index: 1, kind: input, shape index: {}]
  %s2 = inlined_call_operand.vmem [shape: bf16[128,128], index: 2, kind: output, shape index: {}]
  %s3 = sld [smem:[#allocation0]]
  $region26: #{gcn_forward.4} parent=0
    _
  %s5 = ssub.s32 1, %s3
  %s6 = scalar_select 0, %s5, %s3
  // Predicated region
  $region2: #{gcn_forward.4} parent=0 // pred_check
    _
  $region3: #{gcn_forward.4} parent=0 // pred_check_branch
    %8 = sbr.rel (0) target = $region5
  $region4: #{gcn_forward.4} parent=0 // pred_region
    _
  $region5: #{gcn_forward.4} parent=0 // pred_fallthru
    _
  // Predicated region
  $region6: #{gcn_forward.4} parent=0 // pred_check
    _
  $region7: #{gcn_forward.4} parent=0 // pred_check_branch
    %10 = sbr.rel (0) target = $region9
  $region8: #{gcn_forward.4} parent=0 // pred_region
    _
  $region9: #{gcn_forward.4} parent=0 // pred_fallthru
    _
  %p11 = scmp.eq.s32.totalorder 0, 0
  // Predicated region
  $region10: #{gcn_forward.4} parent=0 // pred_check
    %p12 = pneg %p11
  $region11: #{gcn_forward.4} parent=0 // pred_check_branch
    %14 = sbr.rel (%p12) target = $region13
  $region12: #{gcn_forward.4} parent=0 // pred_region
    %15 = vst [vmem:[#allocation2] sm:$0xff] 0.0
    %16 = vst [vmem:[#allocation2 + $0x8] sm:$0xff] 0.0
    %17 = vst [vmem:[#allocation2 + $0x10] sm:$0xff] 0.0
    %18 = vst [vmem:[#allocation2 + $0x18] sm:$0xff] 0.0
    %19 = vst [vmem:[#allocation2 + $0x20] sm:$0xff] 0.0
    %20 = vst [vmem:[#allocation2 + $0x28] sm:$0xff] 0.0
    %21 = vst [vmem:[#allocation2 + $0x30] sm:$0xff] 0.0
    %22 = vst [vmem:[#allocation2 + $0x38] sm:$0xff] 0.0
    %23 = vst [vmem:[#allocation2 + $0x40] sm:$0xff] 0.0
    %24 = vst [vmem:[#allocation2 + $0x48] sm:$0xff] 0.0
    %25 = vst [vmem:[#allocation2 + $0x50] sm:$0xff] 0.0
    %26 = vst [vmem:[#allocation2 + $0x58] sm:$0xff] 0.0
    %27 = vst [vmem:[#allocation2 + $0x60] sm:$0xff] 0.0
    %28 = vst [vmem:[#allocation2 + $0x68] sm:$0xff] 0.0
    %29 = vst [vmem:[#allocation2 + $0x70] sm:$0xff] 0.0
    %30 = vst [vmem:[#allocation2 + $0x78] sm:$0xff] 0.0
  $region13: #{gcn_forward.4} parent=0 // pred_fallthru
    _
  %v31 = vld [vmem:[#allocation2] sm:$0xff]
  %v32 = vld [vmem:[#allocation2 + $0x8] sm:$0xff]
  %v33 = vld [vmem:[#allocation2 + $0x10] sm:$0xff]
  %v34 = vld [vmem:[#allocation2 + $0x18] sm:$0xff]
  %v35 = vld [vmem:[#allocation2 + $0x20] sm:$0xff]
  %v36 = vld [vmem:[#allocation2 + $0x28] sm:$0xff]
  %v37 = vld [vmem:[#allocation2 + $0x30] sm:$0xff]
  %v38 = vld [vmem:[#allocation2 + $0x38] sm:$0xff]
  %v39 = vld [vmem:[#allocation2 + $0x40] sm:$0xff]
  %v40 = vld [vmem:[#allocation2 + $0x48] sm:$0xff]
  %v41 = vld [vmem:[#allocation2 + $0x50] sm:$0xff]
  %v42 = vld [vmem:[#allocation2 + $0x58] sm:$0xff]
  %v43 = vld [vmem:[#allocation2 + $0x60] sm:$0xff]
  %v44 = vld [vmem:[#allocation2 + $0x68] sm:$0xff]
  %v45 = vld [vmem:[#allocation2 + $0x70] sm:$0xff]
  %v46 = vld [vmem:[#allocation2 + $0x78] sm:$0xff]
  %v47 = vld [vmem:[%s0] sm:$0xf]
  %v48 = vld [vmem:[%s0 + $0x4] sm:$0xf]
  %v49 = vld [vmem:[%s0 + $0x8] sm:$0xf]
  %v50 = vld [vmem:[%s0 + $0xc] sm:$0xf]
  %v51 = vld [vmem:[%s0 + $0x10] sm:$0xf]
  %v52 = vld [vmem:[%s0 + $0x14] sm:$0xf]
  %v53 = vld [vmem:[%s0 + $0x18] sm:$0xf]
  %v54 = vld [vmem:[%s0 + $0x1c] sm:$0xf]
  %v55 = vld [vmem:[%s0 + $0x20] sm:$0xf]
  %v56 = vld [vmem:[%s0 + $0x24] sm:$0xf]
  %v57 = vld [vmem:[%s0 + $0x28] sm:$0xf]
  %v58 = vld [vmem:[%s0 + $0x2c] sm:$0xf]
  %v59 = vld [vmem:[%s0 + $0x30] sm:$0xf]
  %v60 = vld [vmem:[%s0 + $0x34] sm:$0xf]
  %v61 = vld [vmem:[%s0 + $0x38] sm:$0xf]
  %v62 = vld [vmem:[%s0 + $0x3c] sm:$0xf]
  %v63 = vld [vmem:[%s1] sm:$0xf]
  %v64 = vld [vmem:[%s1 + $0x4] sm:$0xf]
  %v65 = vld [vmem:[%s1 + $0x8] sm:$0xf]
  %v66 = vld [vmem:[%s1 + $0xc] sm:$0xf]
  %v67 = vld [vmem:[%s1 + $0x10] sm:$0xf]
  %v68 = vld [vmem:[%s1 + $0x14] sm:$0xf]
  %v69 = vld [vmem:[%s1 + $0x18] sm:$0xf]
  %v70 = vld [vmem:[%s1 + $0x1c] sm:$0xf]
  %v71 = vld [vmem:[%s1 + $0x20] sm:$0xf]
  %v72 = vld [vmem:[%s1 + $0x24] sm:$0xf]
  %v73 = vld [vmem:[%s1 + $0x28] sm:$0xf]
  %v74 = vld [vmem:[%s1 + $0x2c] sm:$0xf]
  %v75 = vld [vmem:[%s1 + $0x30] sm:$0xf]
  %v76 = vld [vmem:[%s1 + $0x34] sm:$0xf]
  %v77 = vld [vmem:[%s1 + $0x38] sm:$0xf]
  %v78 = vld [vmem:[%s1 + $0x3c] sm:$0xf]
  %v95 = vunpack.c.l.b16 %v47
  %v96 = vunpack.c.l.b16 %v48
  %v97 = vunpack.c.l.b16 %v49
  %v98 = vunpack.c.l.b16 %v50
  %v99 = vunpack.c.l.b16 %v51
  %v100 = vunpack.c.l.b16 %v52
  %v101 = vunpack.c.l.b16 %v53
  %v102 = vunpack.c.l.b16 %v54
  %v103 = vunpack.c.l.b16 %v55
  %v104 = vunpack.c.l.b16 %v56
  %v105 = vunpack.c.l.b16 %v57
  %v106 = vunpack.c.l.b16 %v58
  %v107 = vunpack.c.l.b16 %v59
  %v108 = vunpack.c.l.b16 %v60
  %v109 = vunpack.c.l.b16 %v61
  %v110 = vunpack.c.l.b16 %v62
  %v111 = vpack.c.b16 %v96, %v95
  %v112 = vpack.c.b16 %v98, %v97
  %v113 = vpack.c.b16 %v100, %v99
  %v114 = vpack.c.b16 %v102, %v101
  %v115 = vpack.c.b16 %v104, %v103
  %v116 = vpack.c.b16 %v106, %v105
  %v117 = vpack.c.b16 %v108, %v107
  %v118 = vpack.c.b16 %v110, %v109
  %v143 = vunpack.c.l.b16 %v63
  %v144 = vunpack.c.l.b16 %v64
  %v145 = vunpack.c.l.b16 %v65
  %v146 = vunpack.c.l.b16 %v66
  %v147 = vunpack.c.l.b16 %v67
  %v148 = vunpack.c.l.b16 %v68
  %v149 = vunpack.c.l.b16 %v69
  %v150 = vunpack.c.l.b16 %v70
  %v151 = vunpack.c.l.b16 %v71
  %v152 = vunpack.c.l.b16 %v72
  %v153 = vunpack.c.l.b16 %v73
  %v154 = vunpack.c.l.b16 %v74
  %v155 = vunpack.c.l.b16 %v75
  %v156 = vunpack.c.l.b16 %v76
  %v157 = vunpack.c.l.b16 %v77
  %v158 = vunpack.c.l.b16 %v78
  %v159 = vpack.c.b16 %v144, %v143
  %v160 = vpack.c.b16 %v146, %v145
  %v161 = vpack.c.b16 %v148, %v147
  %v162 = vpack.c.b16 %v150, %v149
  %v163 = vpack.c.b16 %v152, %v151
  %v164 = vpack.c.b16 %v154, %v153
  %v165 = vpack.c.b16 %v156, %v155
  %v166 = vpack.c.b16 %v158, %v157
  %175 = vmatpush.bf16.msra.mxu0 %v166
  %176 = vmatpush.bf16.msra.mxu0 %v165
  %177 = vmatpush.bf16.msra.mxu0 %v164
  %178 = vmatpush.bf16.msra.mxu0 %v163
  %179 = vmatpush.bf16.msra.mxu0 %v162
  %180 = vmatpush.bf16.msra.mxu0 %v161
  %181 = vmatpush.bf16.msra.mxu0 %v160
  %182 = vmatpush.bf16.msra.mxu0 %v159
  %183 = vmatmul.bf16.gmra.mxu0 %v111
  %v184 = vpop.f32.mrf.mxu0
  %v185 = vadd.f32 0.0, %v184
  %v186 = vpop.f32.mrf.mxu0
  %v187 = vadd.f32 0.0, %v186
  %188 = vmatmul.bf16.gmra.mxu0 %v112
  %v189 = vpop.f32.mrf.mxu0
  %v190 = vadd.f32 0.0, %v189
  %v191 = vpop.f32.mrf.mxu0
  %v192 = vadd.f32 0.0, %v191
  %193 = vmatmul.bf16.gmra.mxu0 %v113
  %v194 = vpop.f32.mrf.mxu0
  %v195 = vadd.f32 0.0, %v194
  %v196 = vpop.f32.mrf.mxu0
  %v197 = vadd.f32 0.0, %v196
  %198 = vmatmul.bf16.gmra.mxu0 %v114
  %v199 = vpop.f32.mrf.mxu0
  %v200 = vadd.f32 0.0, %v199
  %v201 = vpop.f32.mrf.mxu0
  %v202 = vadd.f32 0.0, %v201
  %203 = vmatmul.bf16.gmra.mxu0 %v115
  %v204 = vpop.f32.mrf.mxu0
  %v205 = vadd.f32 0.0, %v204
  %v206 = vpop.f32.mrf.mxu0
  %v207 = vadd.f32 0.0, %v206
  %208 = vmatmul.bf16.gmra.mxu0 %v116
  %v209 = vpop.f32.mrf.mxu0
  %v210 = vadd.f32 0.0, %v209
  %v211 = vpop.f32.mrf.mxu0
  %v212 = vadd.f32 0.0, %v211
  %213 = vmatmul.bf16.gmra.mxu0 %v117
  %v214 = vpop.f32.mrf.mxu0
  %v215 = vadd.f32 0.0, %v214
  %v216 = vpop.f32.mrf.mxu0
  %v217 = vadd.f32 0.0, %v216
  %218 = vmatmul.bf16.gmra.mxu0 %v118
  %v219 = vpop.f32.mrf.mxu0
  %v220 = vadd.f32 0.0, %v219
  %v221 = vpop.f32.mrf.mxu0
  %v222 = vadd.f32 0.0, %v221
  %223 = vdwg.mxu0
  %v224 = vadd.f32 %v31, %v185
  %v225 = vadd.f32 %v32, %v187
  %v226 = vadd.f32 %v33, %v190
  %v227 = vadd.f32 %v34, %v192
  %v228 = vadd.f32 %v35, %v195
  %v229 = vadd.f32 %v36, %v197
  %v230 = vadd.f32 %v37, %v200
  %v231 = vadd.f32 %v38, %v202
  %v232 = vadd.f32 %v39, %v205
  %v233 = vadd.f32 %v40, %v207
  %v234 = vadd.f32 %v41, %v210
  %v235 = vadd.f32 %v42, %v212
  %v236 = vadd.f32 %v43, %v215
  %v237 = vadd.f32 %v44, %v217
  %v238 = vadd.f32 %v45, %v220
  %v239 = vadd.f32 %v46, %v222
  %240 = vst [vmem:[#allocation2] sm:$0xff] %v224
  %241 = vst [vmem:[#allocation2 + $0x8] sm:$0xff] %v225
  %242 = vst [vmem:[#allocation2 + $0x10] sm:$0xff] %v226
  %243 = vst [vmem:[#allocation2 + $0x18] sm:$0xff] %v227
  %244 = vst [vmem:[#allocation2 + $0x20] sm:$0xff] %v228
  %245 = vst [vmem:[#allocation2 + $0x28] sm:$0xff] %v229
  %246 = vst [vmem:[#allocation2 + $0x30] sm:$0xff] %v230
  %247 = vst [vmem:[#allocation2 + $0x38] sm:$0xff] %v231
  %248 = vst [vmem:[#allocation2 + $0x40] sm:$0xff] %v232
  %249 = vst [vmem:[#allocation2 + $0x48] sm:$0xff] %v233
  %250 = vst [vmem:[#allocation2 + $0x50] sm:$0xff] %v234
  %251 = vst [vmem:[#allocation2 + $0x58] sm:$0xff] %v235
  %252 = vst [vmem:[#allocation2 + $0x60] sm:$0xff] %v236
  %253 = vst [vmem:[#allocation2 + $0x68] sm:$0xff] %v237
  %254 = vst [vmem:[#allocation2 + $0x70] sm:$0xff] %v238
  %255 = vst [vmem:[#allocation2 + $0x78] sm:$0xff] %v239
  // Predicated region
  $region14: #{gcn_forward.4} parent=0 // pred_check
    %p256 = pneg %p11
  $region15: #{gcn_forward.4} parent=0 // pred_check_branch
    %258 = sbr.rel (%p256) target = $region17
  $region16: #{gcn_forward.4} parent=0 // pred_region
    %v259 = vld [vmem:[#allocation2] sm:$0xff]
    %v260 = vld [vmem:[#allocation2 + $0x8] sm:$0xff]
    %v261 = vld [vmem:[#allocation2 + $0x10] sm:$0xff]
    %v262 = vld [vmem:[#allocation2 + $0x18] sm:$0xff]
    %v263 = vld [vmem:[#allocation2 + $0x20] sm:$0xff]
    %v264 = vld [vmem:[#allocation2 + $0x28] sm:$0xff]
    %v265 = vld [vmem:[#allocation2 + $0x30] sm:$0xff]
    %v266 = vld [vmem:[#allocation2 + $0x38] sm:$0xff]
    %v267 = vld [vmem:[#allocation2 + $0x40] sm:$0xff]
    %v268 = vld [vmem:[#allocation2 + $0x48] sm:$0xff]
    %v269 = vld [vmem:[#allocation2 + $0x50] sm:$0xff]
    %v270 = vld [vmem:[#allocation2 + $0x58] sm:$0xff]
    %v271 = vld [vmem:[#allocation2 + $0x60] sm:$0xff]
    %v272 = vld [vmem:[#allocation2 + $0x68] sm:$0xff]
    %v273 = vld [vmem:[#allocation2 + $0x70] sm:$0xff]
    %v274 = vld [vmem:[#allocation2 + $0x78] sm:$0xff]
    %v275 = vpack.c.bf16 %v259, %v259
    %v276 = vpack.c.bf16 %v260, %v260
    %v277 = vpack.c.bf16 %v261, %v261
    %v278 = vpack.c.bf16 %v262, %v262
    %v279 = vpack.c.bf16 %v263, %v263
    %v280 = vpack.c.bf16 %v264, %v264
    %v281 = vpack.c.bf16 %v265, %v265
    %v282 = vpack.c.bf16 %v266, %v266
    %v283 = vpack.c.bf16 %v267, %v267
    %v284 = vpack.c.bf16 %v268, %v268
    %v285 = vpack.c.bf16 %v269, %v269
    %v286 = vpack.c.bf16 %v270, %v270
    %v287 = vpack.c.bf16 %v271, %v271
    %v288 = vpack.c.bf16 %v272, %v272
    %v289 = vpack.c.bf16 %v273, %v273
    %v290 = vpack.c.bf16 %v274, %v274
    %291 = vst [vmem:[%s2] sm:$0xf] %v275
    %292 = vst [vmem:[%s2 + $0x4] sm:$0xf] %v276
    %293 = vst [vmem:[%s2 + $0x8] sm:$0xf] %v277
    %294 = vst [vmem:[%s2 + $0xc] sm:$0xf] %v278
    %295 = vst [vmem:[%s2 + $0x10] sm:$0xf] %v279
    %296 = vst [vmem:[%s2 + $0x14] sm:$0xf] %v280
    %297 = vst [vmem:[%s2 + $0x18] sm:$0xf] %v281
    %298 = vst [vmem:[%s2 + $0x1c] sm:$0xf] %v282
    %299 = vst [vmem:[%s2 + $0x20] sm:$0xf] %v283
    %300 = vst [vmem:[%s2 + $0x24] sm:$0xf] %v284
    %301 = vst [vmem:[%s2 + $0x28] sm:$0xf] %v285
    %302 = vst [vmem:[%s2 + $0x2c] sm:$0xf] %v286
    %303 = vst [vmem:[%s2 + $0x30] sm:$0xf] %v287
    %304 = vst [vmem:[%s2 + $0x34] sm:$0xf] %v288
    %305 = vst [vmem:[%s2 + $0x38] sm:$0xf] %v289
    %306 = vst [vmem:[%s2 + $0x3c] sm:$0xf] %v290
  $region17: #{gcn_forward.4} parent=0 // pred_fallthru
    _
  // Predicated region
  $region18: #{gcn_forward.4} parent=0 // pred_check
    _
  $region19: #{gcn_forward.4} parent=0 // pred_check_branch
    %308 = sbr.rel (0) target = $region21
  $region20: #{gcn_forward.4} parent=0 // pred_region
    _
  $region21: #{gcn_forward.4} parent=0 // pred_fallthru
    _
  // Predicated region
  $region22: #{gcn_forward.4} parent=0 // pred_check
    _
  $region23: #{gcn_forward.4} parent=0 // pred_check_branch
    %310 = sbr.rel (0) target = $region25
  $region24: #{gcn_forward.4} parent=0 // pred_region
    _
  $region25: #{gcn_forward.4} parent=0 // pred_fallthru
    _

// kernel: gcn_forward.7
$region0: #{gcn_forward.7}
  #allocation0 [shape = 'u32[]', space=smem, size = 0x4, offset = 0x4, fixed_abs, tag = 'smem constant byte address 0x4 - core index']
  #allocation1 [shape = 'u32[72,128]{1,0:T(1,128)}', space=vmem, size = 0x9000, scoped, tag = 'internal scratch']
  #allocation2 [shape = 'f32[128,128]{1,0:T(8,128)}', space=vmem, size = 0x10000, scoped, tag = 'scratch operand']
  %s0 = inlined_call_operand.vmem [shape: bf16[128,128], index: 0, kind: input, shape index: {}]
  %s1 = inlined_call_operand.vmem [shape: bf16[128,128], index: 1, kind: input, shape index: {}]
  %s2 = inlined_call_operand.vmem [shape: f32[1,128], index: 2, kind: input, shape index: {}]
  %s3 = inlined_call_operand.vmem [shape: f32[128,128], index: 3, kind: output, shape index: {}]
  %s4 = sld [smem:[#allocation0]]
  $region30: #{gcn_forward.7} parent=0
    _
  %s6 = ssub.s32 1, %s4
  %s7 = scalar_select 0, %s6, %s4
  // Predicated region
  $region2: #{gcn_forward.7} parent=0 // pred_check
    _
  $region3: #{gcn_forward.7} parent=0 // pred_check_branch
    %9 = sbr.rel (0) target = $region5
  $region4: #{gcn_forward.7} parent=0 // pred_region
    _
  $region5: #{gcn_forward.7} parent=0 // pred_fallthru
    _
  // Predicated region
  $region6: #{gcn_forward.7} parent=0 // pred_check
    _
  $region7: #{gcn_forward.7} parent=0 // pred_check_branch
    %11 = sbr.rel (0) target = $region9
  $region8: #{gcn_forward.7} parent=0 // pred_region
    _
  $region9: #{gcn_forward.7} parent=0 // pred_fallthru
    _
  // Predicated region
  $region10: #{gcn_forward.7} parent=0 // pred_check
    _
  $region11: #{gcn_forward.7} parent=0 // pred_check_branch
    %13 = sbr.rel (0) target = $region13
  $region12: #{gcn_forward.7} parent=0 // pred_region
    _
  $region13: #{gcn_forward.7} parent=0 // pred_fallthru
    _
  %p14 = scmp.eq.s32.totalorder 0, 0
  // Predicated region
  $region14: #{gcn_forward.7} parent=0 // pred_check
    %p15 = pneg %p14
  $region15: #{gcn_forward.7} parent=0 // pred_check_branch
    %17 = sbr.rel (%p15) target = $region17
  $region16: #{gcn_forward.7} parent=0 // pred_region
    %18 = vst [vmem:[#allocation2] sm:$0xff] 0.0
    %19 = vst [vmem:[#allocation2 + $0x8] sm:$0xff] 0.0
    %20 = vst [vmem:[#allocation2 + $0x10] sm:$0xff] 0.0
    %21 = vst [vmem:[#allocation2 + $0x18] sm:$0xff] 0.0
    %22 = vst [vmem:[#allocation2 + $0x20] sm:$0xff] 0.0
    %23 = vst [vmem:[#allocation2 + $0x28] sm:$0xff] 0.0
    %24 = vst [vmem:[#allocation2 + $0x30] sm:$0xff] 0.0
    %25 = vst [vmem:[#allocation2 + $0x38] sm:$0xff] 0.0
    %26 = vst [vmem:[#allocation2 + $0x40] sm:$0xff] 0.0
    %27 = vst [vmem:[#allocation2 + $0x48] sm:$0xff] 0.0
    %28 = vst [vmem:[#allocation2 + $0x50] sm:$0xff] 0.0
    %29 = vst [vmem:[#allocation2 + $0x58] sm:$0xff] 0.0
    %30 = vst [vmem:[#allocation2 + $0x60] sm:$0xff] 0.0
    %31 = vst [vmem:[#allocation2 + $0x68] sm:$0xff] 0.0
    %32 = vst [vmem:[#allocation2 + $0x70] sm:$0xff] 0.0
    %33 = vst [vmem:[#allocation2 + $0x78] sm:$0xff] 0.0
  $region17: #{gcn_forward.7} parent=0 // pred_fallthru
    _
  %v34 = vld [vmem:[#allocation2] sm:$0xff]
  %v35 = vld [vmem:[#allocation2 + $0x8] sm:$0xff]
  %v36 = vld [vmem:[#allocation2 + $0x10] sm:$0xff]
  %v37 = vld [vmem:[#allocation2 + $0x18] sm:$0xff]
  %v38 = vld [vmem:[#allocation2 + $0x20] sm:$0xff]
  %v39 = vld [vmem:[#allocation2 + $0x28] sm:$0xff]
  %v40 = vld [vmem:[#allocation2 + $0x30] sm:$0xff]
  %v41 = vld [vmem:[#allocation2 + $0x38] sm:$0xff]
  %v42 = vld [vmem:[#allocation2 + $0x40] sm:$0xff]
  %v43 = vld [vmem:[#allocation2 + $0x48] sm:$0xff]
  %v44 = vld [vmem:[#allocation2 + $0x50] sm:$0xff]
  %v45 = vld [vmem:[#allocation2 + $0x58] sm:$0xff]
  %v46 = vld [vmem:[#allocation2 + $0x60] sm:$0xff]
  %v47 = vld [vmem:[#allocation2 + $0x68] sm:$0xff]
  %v48 = vld [vmem:[#allocation2 + $0x70] sm:$0xff]
  %v49 = vld [vmem:[#allocation2 + $0x78] sm:$0xff]
  %v50 = vld [vmem:[%s0] sm:$0xf]
  %v51 = vld [vmem:[%s0 + $0x4] sm:$0xf]
  %v52 = vld [vmem:[%s0 + $0x8] sm:$0xf]
  %v53 = vld [vmem:[%s0 + $0xc] sm:$0xf]
  %v54 = vld [vmem:[%s0 + $0x10] sm:$0xf]
  %v55 = vld [vmem:[%s0 + $0x14] sm:$0xf]
  %v56 = vld [vmem:[%s0 + $0x18] sm:$0xf]
  %v57 = vld [vmem:[%s0 + $0x1c] sm:$0xf]
  %v58 = vld [vmem:[%s0 + $0x20] sm:$0xf]
  %v59 = vld [vmem:[%s0 + $0x24] sm:$0xf]
  %v60 = vld [vmem:[%s0 + $0x28] sm:$0xf]
  %v61 = vld [vmem:[%s0 + $0x2c] sm:$0xf]
  %v62 = vld [vmem:[%s0 + $0x30] sm:$0xf]
  %v63 = vld [vmem:[%s0 + $0x34] sm:$0xf]
  %v64 = vld [vmem:[%s0 + $0x38] sm:$0xf]
  %v65 = vld [vmem:[%s0 + $0x3c] sm:$0xf]
  %v66 = vld [vmem:[%s1] sm:$0xf]
  %v67 = vld [vmem:[%s1 + $0x4] sm:$0xf]
  %v68 = vld [vmem:[%s1 + $0x8] sm:$0xf]
  %v69 = vld [vmem:[%s1 + $0xc] sm:$0xf]
  %v70 = vld [vmem:[%s1 + $0x10] sm:$0xf]
  %v71 = vld [vmem:[%s1 + $0x14] sm:$0xf]
  %v72 = vld [vmem:[%s1 + $0x18] sm:$0xf]
  %v73 = vld [vmem:[%s1 + $0x1c] sm:$0xf]
  %v74 = vld [vmem:[%s1 + $0x20] sm:$0xf]
  %v75 = vld [vmem:[%s1 + $0x24] sm:$0xf]
  %v76 = vld [vmem:[%s1 + $0x28] sm:$0xf]
  %v77 = vld [vmem:[%s1 + $0x2c] sm:$0xf]
  %v78 = vld [vmem:[%s1 + $0x30] sm:$0xf]
  %v79 = vld [vmem:[%s1 + $0x34] sm:$0xf]
  %v80 = vld [vmem:[%s1 + $0x38] sm:$0xf]
  %v81 = vld [vmem:[%s1 + $0x3c] sm:$0xf]
  %v98 = vunpack.c.l.b16 %v50
  %v99 = vunpack.c.l.b16 %v51
  %v100 = vunpack.c.l.b16 %v52
  %v101 = vunpack.c.l.b16 %v53
  %v102 = vunpack.c.l.b16 %v54
  %v103 = vunpack.c.l.b16 %v55
  %v104 = vunpack.c.l.b16 %v56
  %v105 = vunpack.c.l.b16 %v57
  %v106 = vunpack.c.l.b16 %v58
  %v107 = vunpack.c.l.b16 %v59
  %v108 = vunpack.c.l.b16 %v60
  %v109 = vunpack.c.l.b16 %v61
  %v110 = vunpack.c.l.b16 %v62
  %v111 = vunpack.c.l.b16 %v63
  %v112 = vunpack.c.l.b16 %v64
  %v113 = vunpack.c.l.b16 %v65
  %v114 = vpack.c.b16 %v99, %v98
  %v115 = vpack.c.b16 %v101, %v100
  %v116 = vpack.c.b16 %v103, %v102
  %v117 = vpack.c.b16 %v105, %v104
  %v118 = vpack.c.b16 %v107, %v106
  %v119 = vpack.c.b16 %v109, %v108
  %v120 = vpack.c.b16 %v111, %v110
  %v121 = vpack.c.b16 %v113, %v112
  %v146 = vunpack.c.l.b16 %v66
  %v147 = vunpack.c.l.b16 %v67
  %v148 = vunpack.c.l.b16 %v68
  %v149 = vunpack.c.l.b16 %v69
  %v150 = vunpack.c.l.b16 %v70
  %v151 = vunpack.c.l.b16 %v71
  %v152 = vunpack.c.l.b16 %v72
  %v153 = vunpack.c.l.b16 %v73
  %v154 = vunpack.c.l.b16 %v74
  %v155 = vunpack.c.l.b16 %v75
  %v156 = vunpack.c.l.b16 %v76
  %v157 = vunpack.c.l.b16 %v77
  %v158 = vunpack.c.l.b16 %v78
  %v159 = vunpack.c.l.b16 %v79
  %v160 = vunpack.c.l.b16 %v80
  %v161 = vunpack.c.l.b16 %v81
  %v162 = vpack.c.b16 %v147, %v146
  %v163 = vpack.c.b16 %v149, %v148
  %v164 = vpack.c.b16 %v151, %v150
  %v165 = vpack.c.b16 %v153, %v152
  %v166 = vpack.c.b16 %v155, %v154
  %v167 = vpack.c.b16 %v157, %v156
  %v168 = vpack.c.b16 %v159, %v158
  %v169 = vpack.c.b16 %v161, %v160
  %178 = vmatpush.bf16.msra.mxu0 %v169
  %179 = vmatpush.bf16.msra.mxu0 %v168
  %180 = vmatpush.bf16.msra.mxu0 %v167
  %181 = vmatpush.bf16.msra.mxu0 %v166
  %182 = vmatpush.bf16.msra.mxu0 %v165
  %183 = vmatpush.bf16.msra.mxu0 %v164
  %184 = vmatpush.bf16.msra.mxu0 %v163
  %185 = vmatpush.bf16.msra.mxu0 %v162
  %186 = vmatmul.bf16.gmra.mxu0 %v114
  %v187 = vpop.f32.mrf.mxu0
  %v188 = vadd.f32 0.0, %v187
  %v189 = vpop.f32.mrf.mxu0
  %v190 = vadd.f32 0.0, %v189
  %191 = vmatmul.bf16.gmra.mxu0 %v115
  %v192 = vpop.f32.mrf.mxu0
  %v193 = vadd.f32 0.0, %v192
  %v194 = vpop.f32.mrf.mxu0
  %v195 = vadd.f32 0.0, %v194
  %196 = vmatmul.bf16.gmra.mxu0 %v116
  %v197 = vpop.f32.mrf.mxu0
  %v198 = vadd.f32 0.0, %v197
  %v199 = vpop.f32.mrf.mxu0
  %v200 = vadd.f32 0.0, %v199
  %201 = vmatmul.bf16.gmra.mxu0 %v117
  %v202 = vpop.f32.mrf.mxu0
  %v203 = vadd.f32 0.0, %v202
  %v204 = vpop.f32.mrf.mxu0
  %v205 = vadd.f32 0.0, %v204
  %206 = vmatmul.bf16.gmra.mxu0 %v118
  %v207 = vpop.f32.mrf.mxu0
  %v208 = vadd.f32 0.0, %v207
  %v209 = vpop.f32.mrf.mxu0
  %v210 = vadd.f32 0.0, %v209
  %211 = vmatmul.bf16.gmra.mxu0 %v119
  %v212 = vpop.f32.mrf.mxu0
  %v213 = vadd.f32 0.0, %v212
  %v214 = vpop.f32.mrf.mxu0
  %v215 = vadd.f32 0.0, %v214
  %216 = vmatmul.bf16.gmra.mxu0 %v120
  %v217 = vpop.f32.mrf.mxu0
  %v218 = vadd.f32 0.0, %v217
  %v219 = vpop.f32.mrf.mxu0
  %v220 = vadd.f32 0.0, %v219
  %221 = vmatmul.bf16.gmra.mxu0 %v121
  %v222 = vpop.f32.mrf.mxu0
  %v223 = vadd.f32 0.0, %v222
  %v224 = vpop.f32.mrf.mxu0
  %v225 = vadd.f32 0.0, %v224
  %226 = vdwg.mxu0
  %v227 = vadd.f32 %v34, %v188
  %v228 = vadd.f32 %v35, %v190
  %v229 = vadd.f32 %v36, %v193
  %v230 = vadd.f32 %v37, %v195
  %v231 = vadd.f32 %v38, %v198
  %v232 = vadd.f32 %v39, %v200
  %v233 = vadd.f32 %v40, %v203
  %v234 = vadd.f32 %v41, %v205
  %v235 = vadd.f32 %v42, %v208
  %v236 = vadd.f32 %v43, %v210
  %v237 = vadd.f32 %v44, %v213
  %v238 = vadd.f32 %v45, %v215
  %v239 = vadd.f32 %v46, %v218
  %v240 = vadd.f32 %v47, %v220
  %v241 = vadd.f32 %v48, %v223
  %v242 = vadd.f32 %v49, %v225
  %243 = vst [vmem:[#allocation2] sm:$0xff] %v227
  %244 = vst [vmem:[#allocation2 + $0x8] sm:$0xff] %v228
  %245 = vst [vmem:[#allocation2 + $0x10] sm:$0xff] %v229
  %246 = vst [vmem:[#allocation2 + $0x18] sm:$0xff] %v230
  %247 = vst [vmem:[#allocation2 + $0x20] sm:$0xff] %v231
  %248 = vst [vmem:[#allocation2 + $0x28] sm:$0xff] %v232
  %249 = vst [vmem:[#allocation2 + $0x30] sm:$0xff] %v233
  %250 = vst [vmem:[#allocation2 + $0x38] sm:$0xff] %v234
  %251 = vst [vmem:[#allocation2 + $0x40] sm:$0xff] %v235
  %252 = vst [vmem:[#allocation2 + $0x48] sm:$0xff] %v236
  %253 = vst [vmem:[#allocation2 + $0x50] sm:$0xff] %v237
  %254 = vst [vmem:[#allocation2 + $0x58] sm:$0xff] %v238
  %255 = vst [vmem:[#allocation2 + $0x60] sm:$0xff] %v239
  %256 = vst [vmem:[#allocation2 + $0x68] sm:$0xff] %v240
  %257 = vst [vmem:[#allocation2 + $0x70] sm:$0xff] %v241
  %258 = vst [vmem:[#allocation2 + $0x78] sm:$0xff] %v242
  // Predicated region
  $region18: #{gcn_forward.7} parent=0 // pred_check
    %p259 = pneg %p14
  $region19: #{gcn_forward.7} parent=0 // pred_check_branch
    %261 = sbr.rel (%p259) target = $region21
  $region20: #{gcn_forward.7} parent=0 // pred_region
    %v262 = vld [vmem:[#allocation2] sm:$0xff]
    %v263 = vld [vmem:[#allocation2 + $0x8] sm:$0xff]
    %v264 = vld [vmem:[#allocation2 + $0x10] sm:$0xff]
    %v265 = vld [vmem:[#allocation2 + $0x18] sm:$0xff]
    %v266 = vld [vmem:[#allocation2 + $0x20] sm:$0xff]
    %v267 = vld [vmem:[#allocation2 + $0x28] sm:$0xff]
    %v268 = vld [vmem:[#allocation2 + $0x30] sm:$0xff]
    %v269 = vld [vmem:[#allocation2 + $0x38] sm:$0xff]
    %v270 = vld [vmem:[#allocation2 + $0x40] sm:$0xff]
    %v271 = vld [vmem:[#allocation2 + $0x48] sm:$0xff]
    %v272 = vld [vmem:[#allocation2 + $0x50] sm:$0xff]
    %v273 = vld [vmem:[#allocation2 + $0x58] sm:$0xff]
    %v274 = vld [vmem:[#allocation2 + $0x60] sm:$0xff]
    %v275 = vld [vmem:[#allocation2 + $0x68] sm:$0xff]
    %v276 = vld [vmem:[#allocation2 + $0x70] sm:$0xff]
    %v277 = vld [vmem:[#allocation2 + $0x78] sm:$0xff]
    %v278 = vld [vmem:[%s2] sm:$0x1]
    %v280 = vperm.slane %v278, 0
    %v282 = vadd.f32 %v262, %v280
    %v283 = vadd.f32 %v263, %v280
    %v284 = vadd.f32 %v264, %v280
    %v285 = vadd.f32 %v265, %v280
    %v286 = vadd.f32 %v266, %v280
    %v287 = vadd.f32 %v267, %v280
    %v288 = vadd.f32 %v268, %v280
    %v289 = vadd.f32 %v269, %v280
    %v290 = vadd.f32 %v270, %v280
    %v291 = vadd.f32 %v271, %v280
    %v292 = vadd.f32 %v272, %v280
    %v293 = vadd.f32 %v273, %v280
    %v294 = vadd.f32 %v274, %v280
    %v295 = vadd.f32 %v275, %v280
    %v296 = vadd.f32 %v276, %v280
    %v297 = vadd.f32 %v277, %v280
    %298 = vmax.xlane.f32.xlu0 %v282
    %v299 = vpop.xlane.xlu0 %298
    %300 = vmax.xlane.f32.xlu0 %v283
    %v301 = vpop.xlane.xlu0 %300
    %302 = vmax.xlane.f32.xlu0 %v284
    %v303 = vpop.xlane.xlu0 %302
    %304 = vmax.xlane.f32.xlu0 %v285
    %v305 = vpop.xlane.xlu0 %304
    %306 = vmax.xlane.f32.xlu0 %v286
    %v307 = vpop.xlane.xlu0 %306
    %308 = vmax.xlane.f32.xlu0 %v287
    %v309 = vpop.xlane.xlu0 %308
    %310 = vmax.xlane.f32.xlu0 %v288
    %v311 = vpop.xlane.xlu0 %310
    %312 = vmax.xlane.f32.xlu0 %v289
    %v313 = vpop.xlane.xlu0 %312
    %314 = vmax.xlane.f32.xlu0 %v290
    %v315 = vpop.xlane.xlu0 %314
    %316 = vmax.xlane.f32.xlu0 %v291
    %v317 = vpop.xlane.xlu0 %316
    %318 = vmax.xlane.f32.xlu0 %v292
    %v319 = vpop.xlane.xlu0 %318
    %320 = vmax.xlane.f32.xlu0 %v293
    %v321 = vpop.xlane.xlu0 %320
    %322 = vmax.xlane.f32.xlu0 %v294
    %v323 = vpop.xlane.xlu0 %322
    %324 = vmax.xlane.f32.xlu0 %v295
    %v325 = vpop.xlane.xlu0 %324
    %326 = vmax.xlane.f32.xlu0 %v296
    %v327 = vpop.xlane.xlu0 %326
    %328 = vmax.xlane.f32.xlu0 %v297
    %v329 = vpop.xlane.xlu0 %328
    %v330 = vsub.f32 %v282, %v299
    %v331 = vsub.f32 %v283, %v301
    %v332 = vsub.f32 %v284, %v303
    %v333 = vsub.f32 %v285, %v305
    %v334 = vsub.f32 %v286, %v307
    %v335 = vsub.f32 %v287, %v309
    %v336 = vsub.f32 %v288, %v311
    %v337 = vsub.f32 %v289, %v313
    %v338 = vsub.f32 %v290, %v315
    %v339 = vsub.f32 %v291, %v317
    %v340 = vsub.f32 %v292, %v319
    %v341 = vsub.f32 %v293, %v321
    %v342 = vsub.f32 %v294, %v323
    %v343 = vsub.f32 %v295, %v325
    %v344 = vsub.f32 %v296, %v327
    %v345 = vsub.f32 %v297, %v329
    %v346 = vmul.f32 %v330, 1.442695
    %v347 = vpow.pop %v346
    %v348 = vmul.f32 %v331, 1.442695
    %v349 = vpow.pop %v348
    %v350 = vmul.f32 %v332, 1.442695
    %v351 = vpow.pop %v350
    %v352 = vmul.f32 %v333, 1.442695
    %v353 = vpow.pop %v352
    %v354 = vmul.f32 %v334, 1.442695
    %v355 = vpow.pop %v354
    %v356 = vmul.f32 %v335, 1.442695
    %v357 = vpow.pop %v356
    %v358 = vmul.f32 %v336, 1.442695
    %v359 = vpow.pop %v358
    %v360 = vmul.f32 %v337, 1.442695
    %v361 = vpow.pop %v360
    %v362 = vmul.f32 %v338, 1.442695
    %v363 = vpow.pop %v362
    %v364 = vmul.f32 %v339, 1.442695
    %v365 = vpow.pop %v364
    %v366 = vmul.f32 %v340, 1.442695
    %v367 = vpow.pop %v366
    %v368 = vmul.f32 %v341, 1.442695
    %v369 = vpow.pop %v368
    %v370 = vmul.f32 %v342, 1.442695
    %v371 = vpow.pop %v370
    %v372 = vmul.f32 %v343, 1.442695
    %v373 = vpow.pop %v372
    %v374 = vmul.f32 %v344, 1.442695
    %v375 = vpow.pop %v374
    %v376 = vmul.f32 %v345, 1.442695
    %v377 = vpow.pop %v376
    %378 = vadd.xlane.f32.xlu0 %v347
    %v379 = vpop.xlane.xlu0 %378
    %380 = vadd.xlane.f32.xlu0 %v349
    %v381 = vpop.xlane.xlu0 %380
    %382 = vadd.xlane.f32.xlu0 %v351
    %v383 = vpop.xlane.xlu0 %382
    %384 = vadd.xlane.f32.xlu0 %v353
    %v385 = vpop.xlane.xlu0 %384
    %386 = vadd.xlane.f32.xlu0 %v355
    %v387 = vpop.xlane.xlu0 %386
    %388 = vadd.xlane.f32.xlu0 %v357
    %v389 = vpop.xlane.xlu0 %388
    %390 = vadd.xlane.f32.xlu0 %v359
    %v391 = vpop.xlane.xlu0 %390
    %392 = vadd.xlane.f32.xlu0 %v361
    %v393 = vpop.xlane.xlu0 %392
    %394 = vadd.xlane.f32.xlu0 %v363
    %v395 = vpop.xlane.xlu0 %394
    %396 = vadd.xlane.f32.xlu0 %v365
    %v397 = vpop.xlane.xlu0 %396
    %398 = vadd.xlane.f32.xlu0 %v367
    %v399 = vpop.xlane.xlu0 %398
    %400 = vadd.xlane.f32.xlu0 %v369
    %v401 = vpop.xlane.xlu0 %400
    %402 = vadd.xlane.f32.xlu0 %v371
    %v403 = vpop.xlane.xlu0 %402
    %404 = vadd.xlane.f32.xlu0 %v373
    %v405 = vpop.xlane.xlu0 %404
    %406 = vadd.xlane.f32.xlu0 %v375
    %v407 = vpop.xlane.xlu0 %406
    %408 = vadd.xlane.f32.xlu0 %v377
    %v409 = vpop.xlane.xlu0 %408
    %v410 = vlog2.pop %v379
    %v411 = vmul.f32 %v410, 0.6931472
    %v412 = vlog2.pop %v381
    %v413 = vmul.f32 %v412, 0.6931472
    %v414 = vlog2.pop %v383
    %v415 = vmul.f32 %v414, 0.6931472
    %v416 = vlog2.pop %v385
    %v417 = vmul.f32 %v416, 0.6931472
    %v418 = vlog2.pop %v387
    %v419 = vmul.f32 %v418, 0.6931472
    %v420 = vlog2.pop %v389
    %v421 = vmul.f32 %v420, 0.6931472
    %v422 = vlog2.pop %v391
    %v423 = vmul.f32 %v422, 0.6931472
    %v424 = vlog2.pop %v393
    %v425 = vmul.f32 %v424, 0.6931472
    %v426 = vlog2.pop %v395
    %v427 = vmul.f32 %v426, 0.6931472
    %v428 = vlog2.pop %v397
    %v429 = vmul.f32 %v428, 0.6931472
    %v430 = vlog2.pop %v399
    %v431 = vmul.f32 %v430, 0.6931472
    %v432 = vlog2.pop %v401
    %v433 = vmul.f32 %v432, 0.6931472
    %v434 = vlog2.pop %v403
    %v435 = vmul.f32 %v434, 0.6931472
    %v436 = vlog2.pop %v405
    %v437 = vmul.f32 %v436, 0.6931472
    %v438 = vlog2.pop %v407
    %v439 = vmul.f32 %v438, 0.6931472
    %v440 = vlog2.pop %v409
    %v441 = vmul.f32 %v440, 0.6931472
    %v442 = vsub.f32 %v330, %v411
    %v443 = vsub.f32 %v331, %v413
    %v444 = vsub.f32 %v332, %v415
    %v445 = vsub.f32 %v333, %v417
    %v446 = vsub.f32 %v334, %v419
    %v447 = vsub.f32 %v335, %v421
    %v448 = vsub.f32 %v336, %v423
    %v449 = vsub.f32 %v337, %v425
    %v450 = vsub.f32 %v338, %v427
    %v451 = vsub.f32 %v339, %v429
    %v452 = vsub.f32 %v340, %v431
    %v453 = vsub.f32 %v341, %v433
    %v454 = vsub.f32 %v342, %v435
    %v455 = vsub.f32 %v343, %v437
    %v456 = vsub.f32 %v344, %v439
    %v457 = vsub.f32 %v345, %v441
    %458 = vst [vmem:[%s3] sm:$0xff] %v442
    %459 = vst [vmem:[%s3 + $0x8] sm:$0xff] %v443
    %460 = vst [vmem:[%s3 + $0x10] sm:$0xff] %v444
    %461 = vst [vmem:[%s3 + $0x18] sm:$0xff] %v445
    %462 = vst [vmem:[%s3 + $0x20] sm:$0xff] %v446
    %463 = vst [vmem:[%s3 + $0x28] sm:$0xff] %v447
    %464 = vst [vmem:[%s3 + $0x30] sm:$0xff] %v448
    %465 = vst [vmem:[%s3 + $0x38] sm:$0xff] %v449
    %466 = vst [vmem:[%s3 + $0x40] sm:$0xff] %v450
    %467 = vst [vmem:[%s3 + $0x48] sm:$0xff] %v451
    %468 = vst [vmem:[%s3 + $0x50] sm:$0xff] %v452
    %469 = vst [vmem:[%s3 + $0x58] sm:$0xff] %v453
    %470 = vst [vmem:[%s3 + $0x60] sm:$0xff] %v454
    %471 = vst [vmem:[%s3 + $0x68] sm:$0xff] %v455
    %472 = vst [vmem:[%s3 + $0x70] sm:$0xff] %v456
    %473 = vst [vmem:[%s3 + $0x78] sm:$0xff] %v457
  $region21: #{gcn_forward.7} parent=0 // pred_fallthru
    _
  // Predicated region
  $region22: #{gcn_forward.7} parent=0 // pred_check
    _
  $region23: #{gcn_forward.7} parent=0 // pred_check_branch
    %475 = sbr.rel (0) target = $region25
  $region24: #{gcn_forward.7} parent=0 // pred_region
    _
  $region25: #{gcn_forward.7} parent=0 // pred_fallthru
    _
  // Predicated region
  $region26: #{gcn_forward.7} parent=0 // pred_check
    _
  $region27: #{gcn_forward.7} parent=0 // pred_check_branch
    %477 = sbr.rel (0) target = $region29
  $region28: #{gcn_forward.7} parent=0 // pred_region
    _
  $region29: #{gcn_forward.7} parent=0 // pred_fallthru
    _

// kernel: gcn_forward.5
$region0: #{gcn_forward.5}
  #allocation0 [shape = 'u32[]', space=smem, size = 0x4, offset = 0x4, fixed_abs, tag = 'smem constant byte address 0x4 - core index']
  #allocation1 [shape = 'u32[72,128]{1,0:T(1,128)}', space=vmem, size = 0x9000, scoped, tag = 'internal scratch']
  #allocation2 [shape = 'f32[128,128]{1,0:T(8,128)}', space=vmem, size = 0x10000, scoped, tag = 'scratch operand']
  %s0 = inlined_call_operand.vmem [shape: bf16[128,128], index: 0, kind: input, shape index: {}]
  %s1 = inlined_call_operand.vmem [shape: bf16[128,128], index: 1, kind: input, shape index: {}]
  %s2 = inlined_call_operand.vmem [shape: f32[1,128], index: 2, kind: input, shape index: {}]
  %s3 = inlined_call_operand.vmem [shape: bf16[128,128], index: 3, kind: output, shape index: {}]
  %s4 = sld [smem:[#allocation0]]
  $region30: #{gcn_forward.5} parent=0
    _
  %s6 = ssub.s32 1, %s4
  %s7 = scalar_select 0, %s6, %s4
  // Predicated region
  $region2: #{gcn_forward.5} parent=0 // pred_check
    _
  $region3: #{gcn_forward.5} parent=0 // pred_check_branch
    %9 = sbr.rel (0) target = $region5
  $region4: #{gcn_forward.5} parent=0 // pred_region
    _
  $region5: #{gcn_forward.5} parent=0 // pred_fallthru
    _
  // Predicated region
  $region6: #{gcn_forward.5} parent=0 // pred_check
    _
  $region7: #{gcn_forward.5} parent=0 // pred_check_branch
    %11 = sbr.rel (0) target = $region9
  $region8: #{gcn_forward.5} parent=0 // pred_region
    _
  $region9: #{gcn_forward.5} parent=0 // pred_fallthru
    _
  // Predicated region
  $region10: #{gcn_forward.5} parent=0 // pred_check
    _
  $region11: #{gcn_forward.5} parent=0 // pred_check_branch
    %13 = sbr.rel (0) target = $region13
  $region12: #{gcn_forward.5} parent=0 // pred_region
    _
  $region13: #{gcn_forward.5} parent=0 // pred_fallthru
    _
  %p14 = scmp.eq.s32.totalorder 0, 0
  // Predicated region
  $region14: #{gcn_forward.5} parent=0 // pred_check
    %p15 = pneg %p14
  $region15: #{gcn_forward.5} parent=0 // pred_check_branch
    %17 = sbr.rel (%p15) target = $region17
  $region16: #{gcn_forward.5} parent=0 // pred_region
    %18 = vst [vmem:[#allocation2] sm:$0xff] 0.0
    %19 = vst [vmem:[#allocation2 + $0x8] sm:$0xff] 0.0
    %20 = vst [vmem:[#allocation2 + $0x10] sm:$0xff] 0.0
    %21 = vst [vmem:[#allocation2 + $0x18] sm:$0xff] 0.0
    %22 = vst [vmem:[#allocation2 + $0x20] sm:$0xff] 0.0
    %23 = vst [vmem:[#allocation2 + $0x28] sm:$0xff] 0.0
    %24 = vst [vmem:[#allocation2 + $0x30] sm:$0xff] 0.0
    %25 = vst [vmem:[#allocation2 + $0x38] sm:$0xff] 0.0
    %26 = vst [vmem:[#allocation2 + $0x40] sm:$0xff] 0.0
    %27 = vst [vmem:[#allocation2 + $0x48] sm:$0xff] 0.0
    %28 = vst [vmem:[#allocation2 + $0x50] sm:$0xff] 0.0
    %29 = vst [vmem:[#allocation2 + $0x58] sm:$0xff] 0.0
    %30 = vst [vmem:[#allocation2 + $0x60] sm:$0xff] 0.0
    %31 = vst [vmem:[#allocation2 + $0x68] sm:$0xff] 0.0
    %32 = vst [vmem:[#allocation2 + $0x70] sm:$0xff] 0.0
    %33 = vst [vmem:[#allocation2 + $0x78] sm:$0xff] 0.0
  $region17: #{gcn_forward.5} parent=0 // pred_fallthru
    _
  %v34 = vld [vmem:[#allocation2] sm:$0xff]
  %v35 = vld [vmem:[#allocation2 + $0x8] sm:$0xff]
  %v36 = vld [vmem:[#allocation2 + $0x10] sm:$0xff]
  %v37 = vld [vmem:[#allocation2 + $0x18] sm:$0xff]
  %v38 = vld [vmem:[#allocation2 + $0x20] sm:$0xff]
  %v39 = vld [vmem:[#allocation2 + $0x28] sm:$0xff]
  %v40 = vld [vmem:[#allocation2 + $0x30] sm:$0xff]
  %v41 = vld [vmem:[#allocation2 + $0x38] sm:$0xff]
  %v42 = vld [vmem:[#allocation2 + $0x40] sm:$0xff]
  %v43 = vld [vmem:[#allocation2 + $0x48] sm:$0xff]
  %v44 = vld [vmem:[#allocation2 + $0x50] sm:$0xff]
  %v45 = vld [vmem:[#allocation2 + $0x58] sm:$0xff]
  %v46 = vld [vmem:[#allocation2 + $0x60] sm:$0xff]
  %v47 = vld [vmem:[#allocation2 + $0x68] sm:$0xff]
  %v48 = vld [vmem:[#allocation2 + $0x70] sm:$0xff]
  %v49 = vld [vmem:[#allocation2 + $0x78] sm:$0xff]
  %v50 = vld [vmem:[%s0] sm:$0xf]
  %v51 = vld [vmem:[%s0 + $0x4] sm:$0xf]
  %v52 = vld [vmem:[%s0 + $0x8] sm:$0xf]
  %v53 = vld [vmem:[%s0 + $0xc] sm:$0xf]
  %v54 = vld [vmem:[%s0 + $0x10] sm:$0xf]
  %v55 = vld [vmem:[%s0 + $0x14] sm:$0xf]
  %v56 = vld [vmem:[%s0 + $0x18] sm:$0xf]
  %v57 = vld [vmem:[%s0 + $0x1c] sm:$0xf]
  %v58 = vld [vmem:[%s0 + $0x20] sm:$0xf]
  %v59 = vld [vmem:[%s0 + $0x24] sm:$0xf]
  %v60 = vld [vmem:[%s0 + $0x28] sm:$0xf]
  %v61 = vld [vmem:[%s0 + $0x2c] sm:$0xf]
  %v62 = vld [vmem:[%s0 + $0x30] sm:$0xf]
  %v63 = vld [vmem:[%s0 + $0x34] sm:$0xf]
  %v64 = vld [vmem:[%s0 + $0x38] sm:$0xf]
  %v65 = vld [vmem:[%s0 + $0x3c] sm:$0xf]
  %v66 = vld [vmem:[%s1] sm:$0xf]
  %v67 = vld [vmem:[%s1 + $0x4] sm:$0xf]
  %v68 = vld [vmem:[%s1 + $0x8] sm:$0xf]
  %v69 = vld [vmem:[%s1 + $0xc] sm:$0xf]
  %v70 = vld [vmem:[%s1 + $0x10] sm:$0xf]
  %v71 = vld [vmem:[%s1 + $0x14] sm:$0xf]
  %v72 = vld [vmem:[%s1 + $0x18] sm:$0xf]
  %v73 = vld [vmem:[%s1 + $0x1c] sm:$0xf]
  %v74 = vld [vmem:[%s1 + $0x20] sm:$0xf]
  %v75 = vld [vmem:[%s1 + $0x24] sm:$0xf]
  %v76 = vld [vmem:[%s1 + $0x28] sm:$0xf]
  %v77 = vld [vmem:[%s1 + $0x2c] sm:$0xf]
  %v78 = vld [vmem:[%s1 + $0x30] sm:$0xf]
  %v79 = vld [vmem:[%s1 + $0x34] sm:$0xf]
  %v80 = vld [vmem:[%s1 + $0x38] sm:$0xf]
  %v81 = vld [vmem:[%s1 + $0x3c] sm:$0xf]
  %v98 = vunpack.c.l.b16 %v50
  %v99 = vunpack.c.l.b16 %v51
  %v100 = vunpack.c.l.b16 %v52
  %v101 = vunpack.c.l.b16 %v53
  %v102 = vunpack.c.l.b16 %v54
  %v103 = vunpack.c.l.b16 %v55
  %v104 = vunpack.c.l.b16 %v56
  %v105 = vunpack.c.l.b16 %v57
  %v106 = vunpack.c.l.b16 %v58
  %v107 = vunpack.c.l.b16 %v59
  %v108 = vunpack.c.l.b16 %v60
  %v109 = vunpack.c.l.b16 %v61
  %v110 = vunpack.c.l.b16 %v62
  %v111 = vunpack.c.l.b16 %v63
  %v112 = vunpack.c.l.b16 %v64
  %v113 = vunpack.c.l.b16 %v65
  %v114 = vpack.c.b16 %v99, %v98
  %v115 = vpack.c.b16 %v101, %v100
  %v116 = vpack.c.b16 %v103, %v102
  %v117 = vpack.c.b16 %v105, %v104
  %v118 = vpack.c.b16 %v107, %v106
  %v119 = vpack.c.b16 %v109, %v108
  %v120 = vpack.c.b16 %v111, %v110
  %v121 = vpack.c.b16 %v113, %v112
  %v146 = vunpack.c.l.b16 %v66
  %v147 = vunpack.c.l.b16 %v67
  %v148 = vunpack.c.l.b16 %v68
  %v149 = vunpack.c.l.b16 %v69
  %v150 = vunpack.c.l.b16 %v70
  %v151 = vunpack.c.l.b16 %v71
  %v152 = vunpack.c.l.b16 %v72
  %v153 = vunpack.c.l.b16 %v73
  %v154 = vunpack.c.l.b16 %v74
  %v155 = vunpack.c.l.b16 %v75
  %v156 = vunpack.c.l.b16 %v76
  %v157 = vunpack.c.l.b16 %v77
  %v158 = vunpack.c.l.b16 %v78
  %v159 = vunpack.c.l.b16 %v79
  %v160 = vunpack.c.l.b16 %v80
  %v161 = vunpack.c.l.b16 %v81
  %v162 = vpack.c.b16 %v147, %v146
  %v163 = vpack.c.b16 %v149, %v148
  %v164 = vpack.c.b16 %v151, %v150
  %v165 = vpack.c.b16 %v153, %v152
  %v166 = vpack.c.b16 %v155, %v154
  %v167 = vpack.c.b16 %v157, %v156
  %v168 = vpack.c.b16 %v159, %v158
  %v169 = vpack.c.b16 %v161, %v160
  %178 = vmatpush.bf16.msra.mxu0 %v169
  %179 = vmatpush.bf16.msra.mxu0 %v168
  %180 = vmatpush.bf16.msra.mxu0 %v167
  %181 = vmatpush.bf16.msra.mxu0 %v166
  %182 = vmatpush.bf16.msra.mxu0 %v165
  %183 = vmatpush.bf16.msra.mxu0 %v164
  %184 = vmatpush.bf16.msra.mxu0 %v163
  %185 = vmatpush.bf16.msra.mxu0 %v162
  %186 = vmatmul.bf16.gmra.mxu0 %v114
  %v187 = vpop.f32.mrf.mxu0
  %v188 = vadd.f32 0.0, %v187
  %v189 = vpop.f32.mrf.mxu0
  %v190 = vadd.f32 0.0, %v189
  %191 = vmatmul.bf16.gmra.mxu0 %v115
  %v192 = vpop.f32.mrf.mxu0
  %v193 = vadd.f32 0.0, %v192
  %v194 = vpop.f32.mrf.mxu0
  %v195 = vadd.f32 0.0, %v194
  %196 = vmatmul.bf16.gmra.mxu0 %v116
  %v197 = vpop.f32.mrf.mxu0
  %v198 = vadd.f32 0.0, %v197
  %v199 = vpop.f32.mrf.mxu0
  %v200 = vadd.f32 0.0, %v199
  %201 = vmatmul.bf16.gmra.mxu0 %v117
  %v202 = vpop.f32.mrf.mxu0
  %v203 = vadd.f32 0.0, %v202
  %v204 = vpop.f32.mrf.mxu0
  %v205 = vadd.f32 0.0, %v204
  %206 = vmatmul.bf16.gmra.mxu0 %v118
  %v207 = vpop.f32.mrf.mxu0
  %v208 = vadd.f32 0.0, %v207
  %v209 = vpop.f32.mrf.mxu0
  %v210 = vadd.f32 0.0, %v209
  %211 = vmatmul.bf16.gmra.mxu0 %v119
  %v212 = vpop.f32.mrf.mxu0
  %v213 = vadd.f32 0.0, %v212
  %v214 = vpop.f32.mrf.mxu0
  %v215 = vadd.f32 0.0, %v214
  %216 = vmatmul.bf16.gmra.mxu0 %v120
  %v217 = vpop.f32.mrf.mxu0
  %v218 = vadd.f32 0.0, %v217
  %v219 = vpop.f32.mrf.mxu0
  %v220 = vadd.f32 0.0, %v219
  %221 = vmatmul.bf16.gmra.mxu0 %v121
  %v222 = vpop.f32.mrf.mxu0
  %v223 = vadd.f32 0.0, %v222
  %v224 = vpop.f32.mrf.mxu0
  %v225 = vadd.f32 0.0, %v224
  %226 = vdwg.mxu0
  %v227 = vadd.f32 %v34, %v188
  %v228 = vadd.f32 %v35, %v190
  %v229 = vadd.f32 %v36, %v193
  %v230 = vadd.f32 %v37, %v195
  %v231 = vadd.f32 %v38, %v198
  %v232 = vadd.f32 %v39, %v200
  %v233 = vadd.f32 %v40, %v203
  %v234 = vadd.f32 %v41, %v205
  %v235 = vadd.f32 %v42, %v208
  %v236 = vadd.f32 %v43, %v210
  %v237 = vadd.f32 %v44, %v213
  %v238 = vadd.f32 %v45, %v215
  %v239 = vadd.f32 %v46, %v218
  %v240 = vadd.f32 %v47, %v220
  %v241 = vadd.f32 %v48, %v223
  %v242 = vadd.f32 %v49, %v225
  %243 = vst [vmem:[#allocation2] sm:$0xff] %v227
  %244 = vst [vmem:[#allocation2 + $0x8] sm:$0xff] %v228
  %245 = vst [vmem:[#allocation2 + $0x10] sm:$0xff] %v229
  %246 = vst [vmem:[#allocation2 + $0x18] sm:$0xff] %v230
  %247 = vst [vmem:[#allocation2 + $0x20] sm:$0xff] %v231
  %248 = vst [vmem:[#allocation2 + $0x28] sm:$0xff] %v232
  %249 = vst [vmem:[#allocation2 + $0x30] sm:$0xff] %v233
  %250 = vst [vmem:[#allocation2 + $0x38] sm:$0xff] %v234
  %251 = vst [vmem:[#allocation2 + $0x40] sm:$0xff] %v235
  %252 = vst [vmem:[#allocation2 + $0x48] sm:$0xff] %v236
  %253 = vst [vmem:[#allocation2 + $0x50] sm:$0xff] %v237
  %254 = vst [vmem:[#allocation2 + $0x58] sm:$0xff] %v238
  %255 = vst [vmem:[#allocation2 + $0x60] sm:$0xff] %v239
  %256 = vst [vmem:[#allocation2 + $0x68] sm:$0xff] %v240
  %257 = vst [vmem:[#allocation2 + $0x70] sm:$0xff] %v241
  %258 = vst [vmem:[#allocation2 + $0x78] sm:$0xff] %v242
  // Predicated region
  $region18: #{gcn_forward.5} parent=0 // pred_check
    %p259 = pneg %p14
  $region19: #{gcn_forward.5} parent=0 // pred_check_branch
    %261 = sbr.rel (%p259) target = $region21
  $region20: #{gcn_forward.5} parent=0 // pred_region
    %v262 = vld [vmem:[#allocation2] sm:$0xff]
    %v263 = vld [vmem:[#allocation2 + $0x8] sm:$0xff]
    %v264 = vld [vmem:[#allocation2 + $0x10] sm:$0xff]
    %v265 = vld [vmem:[#allocation2 + $0x18] sm:$0xff]
    %v266 = vld [vmem:[#allocation2 + $0x20] sm:$0xff]
    %v267 = vld [vmem:[#allocation2 + $0x28] sm:$0xff]
    %v268 = vld [vmem:[#allocation2 + $0x30] sm:$0xff]
    %v269 = vld [vmem:[#allocation2 + $0x38] sm:$0xff]
    %v270 = vld [vmem:[#allocation2 + $0x40] sm:$0xff]
    %v271 = vld [vmem:[#allocation2 + $0x48] sm:$0xff]
    %v272 = vld [vmem:[#allocation2 + $0x50] sm:$0xff]
    %v273 = vld [vmem:[#allocation2 + $0x58] sm:$0xff]
    %v274 = vld [vmem:[#allocation2 + $0x60] sm:$0xff]
    %v275 = vld [vmem:[#allocation2 + $0x68] sm:$0xff]
    %v276 = vld [vmem:[#allocation2 + $0x70] sm:$0xff]
    %v277 = vld [vmem:[#allocation2 + $0x78] sm:$0xff]
    %v278 = vld [vmem:[%s2] sm:$0x1]
    %v280 = vperm.slane %v278, 0
    %v282 = vadd.f32 %v262, %v280
    %v283 = vadd.f32 %v263, %v280
    %v284 = vadd.f32 %v264, %v280
    %v285 = vadd.f32 %v265, %v280
    %v286 = vadd.f32 %v266, %v280
    %v287 = vadd.f32 %v267, %v280
    %v288 = vadd.f32 %v268, %v280
    %v289 = vadd.f32 %v269, %v280
    %v290 = vadd.f32 %v270, %v280
    %v291 = vadd.f32 %v271, %v280
    %v292 = vadd.f32 %v272, %v280
    %v293 = vadd.f32 %v273, %v280
    %v294 = vadd.f32 %v274, %v280
    %v295 = vadd.f32 %v275, %v280
    %v296 = vadd.f32 %v276, %v280
    %v297 = vadd.f32 %v277, %v280
    %v298 = vmax.f32 %v282, 0.0
    %v299 = vmax.f32 %v283, 0.0
    %v300 = vmax.f32 %v284, 0.0
    %v301 = vmax.f32 %v285, 0.0
    %v302 = vmax.f32 %v286, 0.0
    %v303 = vmax.f32 %v287, 0.0
    %v304 = vmax.f32 %v288, 0.0
    %v305 = vmax.f32 %v289, 0.0
    %v306 = vmax.f32 %v290, 0.0
    %v307 = vmax.f32 %v291, 0.0
    %v308 = vmax.f32 %v292, 0.0
    %v309 = vmax.f32 %v293, 0.0
    %v310 = vmax.f32 %v294, 0.0
    %v311 = vmax.f32 %v295, 0.0
    %v312 = vmax.f32 %v296, 0.0
    %v313 = vmax.f32 %v297, 0.0
    %v314 = vpack.c.bf16 %v298, %v298
    %v315 = vpack.c.bf16 %v299, %v299
    %v316 = vpack.c.bf16 %v300, %v300
    %v317 = vpack.c.bf16 %v301, %v301
    %v318 = vpack.c.bf16 %v302, %v302
    %v319 = vpack.c.bf16 %v303, %v303
    %v320 = vpack.c.bf16 %v304, %v304
    %v321 = vpack.c.bf16 %v305, %v305
    %v322 = vpack.c.bf16 %v306, %v306
    %v323 = vpack.c.bf16 %v307, %v307
    %v324 = vpack.c.bf16 %v308, %v308
    %v325 = vpack.c.bf16 %v309, %v309
    %v326 = vpack.c.bf16 %v310, %v310
    %v327 = vpack.c.bf16 %v311, %v311
    %v328 = vpack.c.bf16 %v312, %v312
    %v329 = vpack.c.bf16 %v313, %v313
    %330 = vst [vmem:[%s3] sm:$0xf] %v314
    %331 = vst [vmem:[%s3 + $0x4] sm:$0xf] %v315
    %332 = vst [vmem:[%s3 + $0x8] sm:$0xf] %v316
    %333 = vst [vmem:[%s3 + $0xc] sm:$0xf] %v317
    %334 = vst [vmem:[%s3 + $0x10] sm:$0xf] %v318
    %335 = vst [vmem:[%s3 + $0x14] sm:$0xf] %v319
    %336 = vst [vmem:[%s3 + $0x18] sm:$0xf] %v320
    %337 = vst [vmem:[%s3 + $0x1c] sm:$0xf] %v321
    %338 = vst [vmem:[%s3 + $0x20] sm:$0xf] %v322
    %339 = vst [vmem:[%s3 + $0x24] sm:$0xf] %v323
    %340 = vst [vmem:[%s3 + $0x28] sm:$0xf] %v324
    %341 = vst [vmem:[%s3 + $0x2c] sm:$0xf] %v325
    %342 = vst [vmem:[%s3 + $0x30] sm:$0xf] %v326
    %343 = vst [vmem:[%s3 + $0x34] sm:$0xf] %v327
    %344 = vst [vmem:[%s3 + $0x38] sm:$0xf] %v328
    %345 = vst [vmem:[%s3 + $0x3c] sm:$0xf] %v329
  $region21: #{gcn_forward.5} parent=0 // pred_fallthru
    _
  // Predicated region
  $region22: #{gcn_forward.5} parent=0 // pred_check
    _
  $region23: #{gcn_forward.5} parent=0 // pred_check_branch
    %347 = sbr.rel (0) target = $region25
  $region24: #{gcn_forward.5} parent=0 // pred_region
    _
  $region25: #{gcn_forward.5} parent=0 // pred_fallthru
    _
  // Predicated region
  $region26: #{gcn_forward.5} parent=0 // pred_check
    _
  $region27: #{gcn_forward.5} parent=0 // pred_check_branch
    %349 = sbr.rel (0) target = $region29
  $region28: #{gcn_forward.5} parent=0 // pred_region
    _
  $region29: #{gcn_forward.5} parent=0 // pred_fallthru
    _

</llo_original>
